<compile_context>
chip_gen: v5e
topology: v5e:2x2
jax: 0.10.0
libtpu: 0.0.40
codegen_flags: <defaults>
</compile_context>

<pallas_src>
import jax
import jax.numpy as jnp
from jax.experimental import pallas as pl
from jax.experimental.pallas import tpu as pltpu

LEAKY_SLOPE = 0.01  # torch.nn.LeakyReLU default negative_slope
HIDDEN = 256


def _round_up(x, m):
    return ((x + m - 1) // m) * m


def _sac_critic_kernel(s_ref, a_ref, w1s_ref, w1a_ref, b1_ref, w2_ref, b2_ref,
                       w3_ref, b3_ref, o_ref):
    """One row tile of the 3-layer MLP: 2 MXU matmuls + VPU/XLU epilogue."""
    cdt = w1s_ref.dtype  # MXU compute dtype (bf16 or f32)

    # fc1 on the split inputs (no concatenated activation ever materialized).
    h = (jnp.dot(s_ref[...].astype(cdt), w1s_ref[...],
                 preferred_element_type=jnp.float32)
         + jnp.dot(a_ref[...].astype(cdt), w1a_ref[...],
                   preferred_element_type=jnp.float32)
         + b1_ref[...])
    # LeakyReLU with slope in (0,1) == max(h, slope*h); single VALU max.
    h = jnp.maximum(h, LEAKY_SLOPE * h)

    # fc2
    h = jnp.dot(h.astype(cdt), w2_ref[...],
                preferred_element_type=jnp.float32) + b2_ref[...]
    h = jnp.maximum(h, LEAKY_SLOPE * h)

    # final_layer (256 -> 1): VPU multiply + lane (XLU) reduction instead of a
    # (tile, 256) @ (256, 1) matmul that would waste 127/128 of MXU columns.
    out_vec = jnp.sum(h * w3_ref[...].astype(jnp.float32), axis=-1) + b3_ref[0]

    # Lane-dense store: one (1, 1, tile) row per grid step.
    o_ref[...] = out_vec.reshape(o_ref.shape).astype(o_ref.dtype)


def sac_critic_forward(states, actions, params, *, tile_m=512,
                       compute_dtype=jnp.bfloat16):
    """states: (B, T, obs_dim), actions: (B, T, act_dim) -> (B, T, 1)."""
    w1, b1, w2, b2, w3, b3 = params
    B, T, obs_dim = states.shape
    act_dim = actions.shape[-1]
    D = obs_dim + act_dim
    M = B * T

    # Row tile: big enough to amortize per-grid-step overhead and fill the MXU,
    # clamped so small inputs don't over-pad.  The last (possibly partial)
    # block reads a few garbage rows; being a purely row-wise MLP those rows
    # only produce garbage outputs, which are sliced off below.
    tile_rows = max(8, min(tile_m, _round_up(M, 8)))
    num_tiles = -(-M // tile_rows)

    # Free, contiguous reshapes — no concat / pad round trip through HBM.
    s2 = states.reshape(M, obs_dim)
    a2 = actions.reshape(M, act_dim)

    # Split W1 into its states / actions halves; cast weights to compute dtype.
    w1s = w1[:obs_dim].astype(compute_dtype)
    w1a = w1[obs_dim:].astype(compute_dtype)
    w2c = w2.astype(compute_dtype)
    w3r = w3.reshape(1, HIDDEN).astype(compute_dtype)     # row vector (VPU path)
    b1r = b1.reshape(1, HIDDEN).astype(jnp.float32)
    b2r = b2.reshape(1, HIDDEN).astype(jnp.float32)
    b3s = b3.reshape(-1).astype(jnp.float32)               # scalar bias -> SMEM

    wsize = jnp.dtype(compute_dtype).itemsize
    m_pad = num_tiles * tile_rows
    flops = 2 * m_pad * (D * HIDDEN + HIDDEN * HIDDEN + HIDDEN)
    bytes_accessed = (4 * M * D
                      + wsize * (D * HIDDEN + HIDDEN * HIDDEN + HIDDEN)
                      + 4 * (2 * HIDDEN + 1)
                      + 4 * m_pad)

    out = pl.pallas_call(
        _sac_critic_kernel,
        out_shape=jax.ShapeDtypeStruct((num_tiles, 1, tile_rows), jnp.float32),
        grid_spec=pltpu.PrefetchScalarGridSpec(
            num_scalar_prefetch=0,
            grid=(num_tiles,),
            in_specs=[
                pl.BlockSpec((tile_rows, obs_dim), lambda i: (i, 0)),   # states
                pl.BlockSpec((tile_rows, act_dim), lambda i: (i, 0)),   # actions
                pl.BlockSpec((obs_dim, HIDDEN), lambda i: (0, 0)),      # W1[:obs]
                pl.BlockSpec((act_dim, HIDDEN), lambda i: (0, 0)),      # W1[obs:]
                pl.BlockSpec((1, HIDDEN), lambda i: (0, 0)),            # b1
                pl.BlockSpec((HIDDEN, HIDDEN), lambda i: (0, 0)),       # W2
                pl.BlockSpec((1, HIDDEN), lambda i: (0, 0)),            # b2
                pl.BlockSpec((1, HIDDEN), lambda i: (0, 0)),            # w3 row
                pl.BlockSpec(memory_space=pltpu.MemorySpace.SMEM),      # b3
            ],
            out_specs=pl.BlockSpec((1, 1, tile_rows), lambda i: (i, 0, 0)),
        ),
        compiler_params=pltpu.CompilerParams(
            dimension_semantics=("parallel",)),
        cost_estimate=pl.CostEstimate(flops=int(flops), transcendentals=0,
                                      bytes_accessed=int(bytes_accessed)),
    )(s2, a2, w1s, w1a, b1r, w2c, b2r, w3r, b3s)

    return out.reshape(m_pad)[:M].reshape(B, T, 1)


def init_sac_critic_params(key, observation_dim, action_dim):
    """Deterministic init mimicking torch.nn.Linear default U(-1/sqrt(fan_in), +).

    Weights are stored transposed w.r.t. PyTorch: (in_features, out_features).
    """
    def linear(k, fan_in, fan_out):
        kw, kb = jax.random.split(k)
        bound = 1.0 / jnp.sqrt(fan_in)
        w = jax.random.uniform(kw, (fan_in, fan_out), jnp.float32, -bound, bound)
        b = jax.random.uniform(kb, (1, fan_out), jnp.float32, -bound, bound)
        return w, b

    k1, k2, k3 = jax.random.split(key, 3)
    in_dim = observation_dim + action_dim
    w1, b1 = linear(k1, in_dim, HIDDEN)
    w2, b2 = linear(k2, HIDDEN, HIDDEN)
    w3, b3 = linear(k3, HIDDEN, 1)
    return (w1, b1, w2, b2, w3, b3)


def _reference_forward(states, actions, params):
    w1, b1, w2, b2, w3, b3 = params
    x = jnp.concatenate([states, actions], axis=2)
    h = x @ w1 + b1
    h = jnp.where(h > 0, h, LEAKY_SLOPE * h)
    h = h @ w2 + b2
    h = jnp.where(h > 0, h, LEAKY_SLOPE * h)
    return h @ w3 + b3


if __name__ == "__main__":
    B, T = 2, 8
    obs_dim, act_dim = 17, 6

    key = jax.random.PRNGKey(0)
    k_s, k_a, k_p = jax.random.split(key, 3)
    states = jax.random.normal(k_s, (B, T, obs_dim), jnp.float32)
    actions = jax.random.normal(k_a, (B, T, act_dim), jnp.float32)
    params = init_sac_critic_params(k_p, obs_dim, act_dim)

    ref = _reference_forward(states, actions, params)

    # Exact-precision path (f32 weights) — tight check of the semantics.
    out_f32 = jax.jit(lambda s, a: sac_critic_forward(
        s, a, params, compute_dtype=jnp.float32))(states, actions)
    out_f32 = jax.block_until_ready(out_f32)
    assert out_f32.shape == (B, T, 1), out_f32.shape
    assert jnp.allclose(out_f32, ref, atol=1e-4, rtol=1e-4), \
        float(jnp.max(jnp.abs(out_f32 - ref)))

    # Fast path (bf16 weights on the MXU, f32 accumulate) — default.
    out_bf16 = jax.jit(lambda s, a: sac_critic_forward(
        s, a, params))(states, actions)
    out_bf16 = jax.block_until_ready(out_bf16)
    assert out_bf16.shape == (B, T, 1), out_bf16.shape
    assert jnp.allclose(out_bf16, ref, atol=2e-2, rtol=2e-2), \
        float(jnp.max(jnp.abs(out_bf16 - ref)))

    print("KERNEL_OK")
</pallas_src>

<mosaic_0001>
module attributes {stable_mosaic.version = 11 : i64} {
  func.func @_sac_critic_kernel(%arg0: i32, %arg1: memref<16x17xf32, #tpu.memory_space<vmem>>, %arg2: memref<16x6xf32, #tpu.memory_space<vmem>>, %arg3: memref<17x256xf32, #tpu.memory_space<vmem>>, %arg4: memref<6x256xf32, #tpu.memory_space<vmem>>, %arg5: memref<1x256xf32, #tpu.memory_space<vmem>>, %arg6: memref<256x256xf32, #tpu.memory_space<vmem>>, %arg7: memref<1x256xf32, #tpu.memory_space<vmem>>, %arg8: memref<1x256xf32, #tpu.memory_space<vmem>>, %arg9: memref<1xf32, #tpu.memory_space<smem>>, %arg10: memref<1x1x16xf32, #tpu.memory_space<vmem>>) attributes {dimension_semantics = [#tpu.dimension_semantics<parallel>], iteration_bounds = array<i64: 1>, scalar_prefetch = 0 : i64, scratch_operands = 0 : i64, tpu.core_type = #tpu.core_type<tc>, window_params = [{transform_indices = @transform_0, window_bounds = array<i64: 16, 17>}, {transform_indices = @transform_1, window_bounds = array<i64: 16, 6>}, {pipeline_mode = #tpu.pipeline_mode<synchronous>, transform_indices = @transform_2, window_bounds = array<i64: 17, 256>}, {pipeline_mode = #tpu.pipeline_mode<synchronous>, transform_indices = @transform_3, window_bounds = array<i64: 6, 256>}, {pipeline_mode = #tpu.pipeline_mode<synchronous>, transform_indices = @transform_4, window_bounds = array<i64: 1, 256>}, {pipeline_mode = #tpu.pipeline_mode<synchronous>, transform_indices = @transform_5, window_bounds = array<i64: 256, 256>}, {pipeline_mode = #tpu.pipeline_mode<synchronous>, transform_indices = @transform_6, window_bounds = array<i64: 1, 256>}, {pipeline_mode = #tpu.pipeline_mode<synchronous>, transform_indices = @transform_7, window_bounds = array<i64: 1, 256>}, {transform_indices = @transform_8, window_bounds = array<i64: 1>}, {transform_indices = @transform_9, window_bounds = array<i64: 1, 1, 16>}]} {
    %c0 = arith.constant 0 : index
    %c0_0 = arith.constant 0 : index
    %0 = vector.load %arg1[%c0, %c0_0] : memref<16x17xf32, #tpu.memory_space<vmem>>, vector<16x17xf32>
    %c0_1 = arith.constant 0 : index
    %c0_2 = arith.constant 0 : index
    %1 = vector.load %arg3[%c0_1, %c0_2] : memref<17x256xf32, #tpu.memory_space<vmem>>, vector<17x256xf32>
    %cst = arith.constant dense<0.000000e+00> : vector<16x256xf32>
    %2 = tpu.matmul %0, %1, %cst {dimension_numbers = #tpu.dot_dimension_numbers<[1], [0], [0], [1], [0, 0, 1, 1], [], []>} : vector<16x17xf32>, vector<17x256xf32>, vector<16x256xf32> -> vector<16x256xf32>
    %c0_3 = arith.constant 0 : index
    %c0_4 = arith.constant 0 : index
    %3 = vector.load %arg2[%c0_3, %c0_4] : memref<16x6xf32, #tpu.memory_space<vmem>>, vector<16x6xf32>
    %c0_5 = arith.constant 0 : index
    %c0_6 = arith.constant 0 : index
    %4 = vector.load %arg4[%c0_5, %c0_6] : memref<6x256xf32, #tpu.memory_space<vmem>>, vector<6x256xf32>
    %cst_7 = arith.constant dense<0.000000e+00> : vector<16x256xf32>
    %5 = tpu.matmul %3, %4, %cst_7 {dimension_numbers = #tpu.dot_dimension_numbers<[1], [0], [0], [1], [0, 0, 1, 1], [], []>} : vector<16x6xf32>, vector<6x256xf32>, vector<16x256xf32> -> vector<16x256xf32>
    %6 = arith.addf %2, %5 : vector<16x256xf32>
    %c0_8 = arith.constant 0 : index
    %c0_9 = arith.constant 0 : index
    %7 = vector.load %arg5[%c0_8, %c0_9] : memref<1x256xf32, #tpu.memory_space<vmem>>, vector<1x256xf32>
    %8 = vector.broadcast %7 : vector<1x256xf32> to vector<16x256xf32>
    %9 = arith.addf %6, %8 : vector<16x256xf32>
    %cst_10 = arith.constant 0.00999999977 : f32
    %10 = vector.broadcast %cst_10 : f32 to vector<16x256xf32>
    %11 = arith.mulf %10, %9 : vector<16x256xf32>
    %12 = arith.maximumf %9, %11 : vector<16x256xf32>
    %c0_11 = arith.constant 0 : index
    %c0_12 = arith.constant 0 : index
    %13 = vector.load %arg6[%c0_11, %c0_12] : memref<256x256xf32, #tpu.memory_space<vmem>>, vector<256x256xf32>
    %cst_13 = arith.constant dense<0.000000e+00> : vector<16x256xf32>
    %14 = tpu.matmul %12, %13, %cst_13 {dimension_numbers = #tpu.dot_dimension_numbers<[1], [0], [0], [1], [0, 0, 1, 1], [], []>} : vector<16x256xf32>, vector<256x256xf32>, vector<16x256xf32> -> vector<16x256xf32>
    %c0_14 = arith.constant 0 : index
    %c0_15 = arith.constant 0 : index
    %15 = vector.load %arg7[%c0_14, %c0_15] : memref<1x256xf32, #tpu.memory_space<vmem>>, vector<1x256xf32>
    %16 = vector.broadcast %15 : vector<1x256xf32> to vector<16x256xf32>
    %17 = arith.addf %14, %16 : vector<16x256xf32>
    %cst_16 = arith.constant 0.00999999977 : f32
    %18 = vector.broadcast %cst_16 : f32 to vector<16x256xf32>
    %19 = arith.mulf %18, %17 : vector<16x256xf32>
    %20 = arith.maximumf %17, %19 : vector<16x256xf32>
    %c0_17 = arith.constant 0 : index
    %c0_18 = arith.constant 0 : index
    %21 = vector.load %arg8[%c0_17, %c0_18] : memref<1x256xf32, #tpu.memory_space<vmem>>, vector<1x256xf32>
    %22 = vector.broadcast %21 : vector<1x256xf32> to vector<16x256xf32>
    %23 = arith.mulf %20, %22 : vector<16x256xf32>
    %cst_19 = arith.constant dense<0.000000e+00> : vector<16xf32>
    %24 = vector.multi_reduction <add>, %23, %cst_19 [1] : vector<16x256xf32> to vector<16xf32>
    %c0_20 = arith.constant 0 : index
    %25 = memref.load %arg9[%c0_20] : memref<1xf32, #tpu.memory_space<smem>>
    %26 = vector.broadcast %25 : f32 to vector<16xf32>
    %27 = arith.addf %24, %26 : vector<16xf32>
    %28 = vector.shape_cast %27 : vector<16xf32> to vector<1x1x16xf32>
    %c0_21 = arith.constant 0 : index
    %c0_22 = arith.constant 0 : index
    %c0_23 = arith.constant 0 : index
    %29 = vector.load %arg10[%c0_21, %c0_22, %c0_23] : memref<1x1x16xf32, #tpu.memory_space<vmem>>, vector<1x1x16xf32>
    tpu.vector_store %arg10[%c0_21, %c0_22, %c0_23], %28 {strides = array<i32>} : memref<1x1x16xf32, #tpu.memory_space<vmem>>, vector<1x1x16xf32>,
    return
  }
  func.func @transform_0(%arg0: i32) -> (i32, i32) {
    %c0_i32 = arith.constant 0 : i32
    %c0_i32_0 = arith.constant 0 : i32
    return %arg0, %c0_i32 : i32, i32
  }
  func.func @transform_1(%arg0: i32) -> (i32, i32) {
    %c0_i32 = arith.constant 0 : i32
    %c0_i32_0 = arith.constant 0 : i32
    return %arg0, %c0_i32 : i32, i32
  }
  func.func @transform_2(%arg0: i32) -> (i32, i32) {
    %c0_i32 = arith.constant 0 : i32
    %c0_i32_0 = arith.constant 0 : i32
    %c0_i32_1 = arith.constant 0 : i32
    return %c0_i32, %c0_i32_0 : i32, i32
  }
  func.func @transform_3(%arg0: i32) -> (i32, i32) {
    %c0_i32 = arith.constant 0 : i32
    %c0_i32_0 = arith.constant 0 : i32
    %c0_i32_1 = arith.constant 0 : i32
    return %c0_i32, %c0_i32_0 : i32, i32
  }
  func.func @transform_4(%arg0: i32) -> (i32, i32) {
    %c0_i32 = arith.constant 0 : i32
    %c0_i32_0 = arith.constant 0 : i32
    %c0_i32_1 = arith.constant 0 : i32
    return %c0_i32, %c0_i32_0 : i32, i32
  }
  func.func @transform_5(%arg0: i32) -> (i32, i32) {
    %c0_i32 = arith.constant 0 : i32
    %c0_i32_0 = arith.constant 0 : i32
    %c0_i32_1 = arith.constant 0 : i32
    return %c0_i32, %c0_i32_0 : i32, i32
  }
  func.func @transform_6(%arg0: i32) -> (i32, i32) {
    %c0_i32 = arith.constant 0 : i32
    %c0_i32_0 = arith.constant 0 : i32
    %c0_i32_1 = arith.constant 0 : i32
    return %c0_i32, %c0_i32_0 : i32, i32
  }
  func.func @transform_7(%arg0: i32) -> (i32, i32) {
    %c0_i32 = arith.constant 0 : i32
    %c0_i32_0 = arith.constant 0 : i32
    %c0_i32_1 = arith.constant 0 : i32
    return %c0_i32, %c0_i32_0 : i32, i32
  }
  func.func @transform_8(%arg0: i32) -> i32 {
    %c0_i32 = arith.constant 0 : i32
    %c0_i32_0 = arith.constant 0 : i32
    return %c0_i32 : i32
  }
  func.func @transform_9(%arg0: i32) -> (i32, i32, i32) {
    %c0_i32 = arith.constant 0 : i32
    %c0_i32_0 = arith.constant 0 : i32
    %c0_i32_1 = arith.constant 0 : i32
    return %arg0, %c0_i32, %c0_i32_0 : i32, i32, i32
  }
}

</mosaic_0001>

<llo_original>
// kernel: _lambda_.1
$region0: #{_lambda_.1}
  #allocation0 [shape = 'u32[]', space=smem, size = 0x4, offset = 0x4, fixed_abs, tag = 'smem constant byte address 0x4 - core index']
  #allocation1 [shape = 'u32[72,128]{1,0:T(1,128)}', space=vmem, size = 0x9000, scoped, tag = 'internal scratch']
  #allocation2 [shape = 'f32[1]{0:T(128)S(6)}', space=smem, size = 0x200, scoped, tag = 'scoped memory for _lambda_.1']
  %s0 = inlined_call_operand.vmem [shape: f32[16,17], index: 0, kind: input, shape index: {}]
  %s1 = inlined_call_operand.vmem [shape: f32[16,6], index: 1, kind: input, shape index: {}]
  %s2 = inlined_call_operand.hbm [shape: f32[17,256], index: 2, kind: input, shape index: {}]
  %s3 = inlined_call_operand.vmem [shape: f32[6,256], index: 3, kind: input, shape index: {}]
  %s4 = inlined_call_operand.vmem [shape: f32[1,256], index: 4, kind: input, shape index: {}]
  %s5 = inlined_call_operand.hbm [shape: f32[256,256], index: 5, kind: input, shape index: {}]
  %s6 = inlined_call_operand.hbm [shape: f32[1,256], index: 6, kind: input, shape index: {}]
  %s7 = inlined_call_operand.hbm [shape: f32[1,256], index: 7, kind: input, shape index: {}]
  %s8 = inlined_call_operand.<no memory space> [shape: f32[1], index: 8, kind: input, shape index: {}]
  %s9 = inlined_call_operand.vmem [shape: f32[1,1,16], index: 9, kind: output, shape index: {}]
  %s10 = sld [smem:[#allocation0]]
  $region62: #{_lambda_.1} parent=0
    _
  %s12 = ssub.s32 1, %s10
  %s13 = scalar_select 0, %s12, %s10
  %14 = sst [smem:[#allocation2]] %s8
  $region1: #{_lambda_.1} parent=0
    #allocation3 [shape = 'u8[24576]{0}', space=vmem, size = 0x6000, scoped, tag = 'input window, operand 2, single buffered']
    #allocation4 [shape = 's32[1]{0}', space=sflag, size = 0x4, scoped, tag = 'scoped memory for _lambda_.1']
    #allocation5 [shape = 'u8[262144]{0}', space=vmem, size = 0x40000, scoped, tag = 'input window, operand 5, single buffered']
    #allocation6 [shape = 's32[1]{0}', space=sflag, size = 0x4, scoped, tag = 'scoped memory for _lambda_.1']
    #allocation7 [shape = 'u8[1024]{0}', space=vmem, size = 0x400, scoped, tag = 'input window, operand 6, single buffered']
    #allocation8 [shape = 'u8[1024]{0}', space=vmem, size = 0x400, scoped, tag = 'input window, operand 7, single buffered']
    #allocation9 [shape = 's32[1]{0}', space=sflag, size = 0x4, scoped, tag = 'scoped memory for _lambda_.1']
    %15 = vsyncpa [#allocation4], 0
    %16 = vsyncpa [#allocation6], 0
    %17 = vsyncpa [#allocation9], 0
    // Predicated region
    $region2: #{_lambda_.1} parent=1 // pred_check
      _
    $region3: #{_lambda_.1} parent=1 // pred_check_branch
      %19 = sbr.rel (0) target = $region5
    $region4: #{_lambda_.1} parent=1 // pred_region
      _
    $region5: #{_lambda_.1} parent=1 // pred_fallthru
      _
    // Predicated region
    $region6: #{_lambda_.1} parent=1 // pred_check
      _
    $region7: #{_lambda_.1} parent=1 // pred_check_branch
      %21 = sbr.rel (0) target = $region9
    $region8: #{_lambda_.1} parent=1 // pred_region
      _
    $region9: #{_lambda_.1} parent=1 // pred_fallthru
      _
    // Predicated region
    $region10: #{_lambda_.1} parent=1 // pred_check
      _
    $region11: #{_lambda_.1} parent=1 // pred_check_branch
      %23 = sbr.rel (0) target = $region13
    $region12: #{_lambda_.1} parent=1 // pred_region
      %25 = vsyncadd [#allocation4], 0
      %s26 = sshll.u32 %s2, 4
      %s27 = int_to_ptr.hbm [resolvable:$true] %s26
      %s28 = sshll.u32 [#allocation3], 4
      %s29 = int_to_ptr.vmem [resolvable:$true] %s28
      %34 = dma.hbm_to_vmem [thread:$0]  %s27, 768, %s29, [#allocation4], 256, 256, 16
    $region13: #{_lambda_.1} parent=1 // pred_fallthru
      _
    // Predicated region
    $region14: #{_lambda_.1} parent=1 // pred_check
      _
    $region15: #{_lambda_.1} parent=1 // pred_check_branch
      %36 = sbr.rel (0) target = $region17
    $region16: #{_lambda_.1} parent=1 // pred_region
      _
    $region17: #{_lambda_.1} parent=1 // pred_fallthru
      _
    // Predicated region
    $region18: #{_lambda_.1} parent=1 // pred_check
      _
    $region19: #{_lambda_.1} parent=1 // pred_check_branch
      %38 = sbr.rel (0) target = $region21
    $region20: #{_lambda_.1} parent=1 // pred_region
      _
    $region21: #{_lambda_.1} parent=1 // pred_fallthru
      _
    // Predicated region
    $region22: #{_lambda_.1} parent=1 // pred_check
      _
    $region23: #{_lambda_.1} parent=1 // pred_check_branch
      %40 = sbr.rel (0) target = $region25
    $region24: #{_lambda_.1} parent=1 // pred_region
      %42 = vsyncadd [#allocation6], 0
      %s43 = sshll.u32 %s5, 4
      %s44 = int_to_ptr.hbm [resolvable:$true] %s43
      %s45 = sshll.u32 [#allocation5], 4
      %s46 = int_to_ptr.vmem [resolvable:$true] %s45
      %51 = dma.hbm_to_vmem [thread:$0]  %s44, 8192, %s46, [#allocation6], 256, 256, 16
    $region25: #{_lambda_.1} parent=1 // pred_fallthru
      _
    // Predicated region
    $region26: #{_lambda_.1} parent=1 // pred_check
      _
    $region27: #{_lambda_.1} parent=1 // pred_check_branch
      %53 = sbr.rel (0) target = $region29
    $region28: #{_lambda_.1} parent=1 // pred_region
      %55 = vsyncadd [#allocation6], 0
      %s57 = sshll.u32 %s6, 4
      %s58 = int_to_ptr.hbm [resolvable:$true] %s57
      %s59 = sshll.u32 [#allocation7], 4
      %s60 = int_to_ptr.vmem [resolvable:$true] %s59
      %62 = dma.hbm_to_vmem [thread:$0]  %s58, 32, %s60, [#allocation6]
    $region29: #{_lambda_.1} parent=1 // pred_fallthru
      _
    // Predicated region
    $region30: #{_lambda_.1} parent=1 // pred_check
      _
    $region31: #{_lambda_.1} parent=1 // pred_check_branch
      %64 = sbr.rel (0) target = $region33
    $region32: #{_lambda_.1} parent=1 // pred_region
      %66 = vsyncadd [#allocation9], 0
      %s68 = sshll.u32 %s7, 4
      %s69 = int_to_ptr.hbm [resolvable:$true] %s68
      %s70 = sshll.u32 [#allocation8], 4
      %s71 = int_to_ptr.vmem [resolvable:$true] %s70
      %73 = dma.hbm_to_vmem [thread:$0]  %s69, 32, %s71, [#allocation9]
    $region33: #{_lambda_.1} parent=1 // pred_fallthru
      _
    // Predicated region
    $region34: #{_lambda_.1} parent=1 // pred_check
      _
    $region35: #{_lambda_.1} parent=1 // pred_check_branch
      %75 = sbr.rel (0) target = $region37
    $region36: #{_lambda_.1} parent=1 // pred_region
      _
    $region37: #{_lambda_.1} parent=1 // pred_fallthru
      _
    // Predicated region
    $region38: #{_lambda_.1} parent=1 // pred_check
      _
    $region39: #{_lambda_.1} parent=1 // pred_check_branch
      %77 = sbr.rel (0) target = $region41
    $region40: #{_lambda_.1} parent=1 // pred_region
      %79 = dma.done [#allocation4], 768
    $region41: #{_lambda_.1} parent=1 // pred_fallthru
      _
    // Predicated region
    $region42: #{_lambda_.1} parent=1 // pred_check
      _
    $region43: #{_lambda_.1} parent=1 // pred_check_branch
      %81 = sbr.rel (0) target = $region45
    $region44: #{_lambda_.1} parent=1 // pred_region
      %83 = dma.done [#allocation6], 8192
    $region45: #{_lambda_.1} parent=1 // pred_fallthru
      _
    // Predicated region
    $region46: #{_lambda_.1} parent=1 // pred_check
      _
    $region47: #{_lambda_.1} parent=1 // pred_check_branch
      %85 = sbr.rel (0) target = $region49
    $region48: #{_lambda_.1} parent=1 // pred_region
      %87 = dma.done [#allocation6], 32
    $region49: #{_lambda_.1} parent=1 // pred_fallthru
      _
    // Predicated region
    $region50: #{_lambda_.1} parent=1 // pred_check
      _
    $region51: #{_lambda_.1} parent=1 // pred_check_branch
      %89 = sbr.rel (0) target = $region53
    $region52: #{_lambda_.1} parent=1 // pred_region
      %91 = dma.done [#allocation9], 32
    $region53: #{_lambda_.1} parent=1 // pred_fallthru
      _
    %v92 = vld [vmem:[%s0] sm:$0xff]
    %v93 = vld [vmem:[%s0 + $0x8] sm:$0xff]
    %v94 = vld [vmem:[#allocation3] sm:$0xff]
    %v95 = vld [vmem:[#allocation3 + $0x8] sm:$0xff]
    %v96 = vld [vmem:[#allocation3 + $0x10] sm:$0xff]
    %v97 = vld [vmem:[#allocation3 + $0x18] sm:$0xff]
    %v98 = vld [vmem:[#allocation3 + $0x20] sm:$0x1]
    %v99 = vld [vmem:[#allocation3 + $0x28] sm:$0x1]
    %v100 = vld [vmem:[%s1] sm:$0xff]
    %v101 = vld [vmem:[%s1 + $0x8] sm:$0xff]
    %v102 = vld [vmem:[%s3] sm:$0x3f]
    %v103 = vld [vmem:[%s3 + $0x8] sm:$0x3f]
    %vm104 = vcmask 48128
    %v106 = vsel %vm104, %v100, 0
    %v109 = vsel %vm104, %v101, 0
    %vm111 = vcmask 1045504
    %v113 = vsel %vm111, %v102, 0
    %v116 = vsel %vm111, %v103, 0
    %118 = vmatpush.msra.mxu0 0.0
    %119 = vmatpush.msra.mxu0 0.0
    %120 = vmatpush.msra.mxu0 0.0
    %121 = vmatpush.msra.mxu0 0.0
    %122 = vmatpush.msra.mxu0 0.0
    %123 = vmatpush.msra.mxu0 0.0
    %124 = vmatpush.msra.mxu0 0.0
    %125 = vmatpush.msra.mxu0 0.0
    %126 = vmatpush.msra.mxu0 0.0
    %127 = vmatpush.msra.mxu0 0.0
    %128 = vmatpush.msra.mxu0 0.0
    %129 = vmatpush.msra.mxu0 0.0
    %130 = vmatpush.msra.mxu0 0.0
    %131 = vmatpush.msra.mxu0 0.0
    %132 = vmatpush.msra.mxu0 0.0
    %133 = vmatpush.msra.mxu0 %v113
    %134 = vmatmul.f32.gmra.mxu0 %v106
    %v135 = vpop.f32.mrf.mxu0
    %v136 = vadd.f32 0.0, %v135
    %137 = vmatmul.f32.gmra.mxu0 %v109
    %v138 = vpop.f32.mrf.mxu0
    %v139 = vadd.f32 0.0, %v138
    %140 = vdwg.mxu0
    %141 = vmatpush.msra.mxu0 0.0
    %142 = vmatpush.msra.mxu0 0.0
    %143 = vmatpush.msra.mxu0 0.0
    %144 = vmatpush.msra.mxu0 0.0
    %145 = vmatpush.msra.mxu0 0.0
    %146 = vmatpush.msra.mxu0 0.0
    %147 = vmatpush.msra.mxu0 0.0
    %148 = vmatpush.msra.mxu0 0.0
    %149 = vmatpush.msra.mxu0 0.0
    %150 = vmatpush.msra.mxu0 0.0
    %151 = vmatpush.msra.mxu0 0.0
    %152 = vmatpush.msra.mxu0 0.0
    %153 = vmatpush.msra.mxu0 0.0
    %154 = vmatpush.msra.mxu0 0.0
    %155 = vmatpush.msra.mxu0 0.0
    %156 = vmatpush.msra.mxu0 %v116
    %157 = vmatmul.f32.gmra.mxu0 %v106
    %v158 = vpop.f32.mrf.mxu0
    %v159 = vadd.f32 0.0, %v158
    %160 = vmatmul.f32.gmra.mxu0 %v109
    %v161 = vpop.f32.mrf.mxu0
    %v162 = vadd.f32 0.0, %v161
    %163 = vdwg.mxu0
    %vm164 = vcmask 138240
    %v166 = vsel %vm164, %v92, 0
    %v169 = vsel %vm164, %v93, 0
    %vm171 = vcmask 1040384
    %v173 = vsel %vm171, %v98, 0
    %v176 = vsel %vm171, %v99, 0
    %178 = vmatpush.msra.mxu0 0.0
    %179 = vmatpush.msra.mxu0 0.0
    %180 = vmatpush.msra.mxu0 0.0
    %181 = vmatpush.msra.mxu0 0.0
    %182 = vmatpush.msra.mxu0 0.0
    %183 = vmatpush.msra.mxu0 0.0
    %184 = vmatpush.msra.mxu0 0.0
    %185 = vmatpush.msra.mxu0 0.0
    %186 = vmatpush.msra.mxu0 0.0
    %187 = vmatpush.msra.mxu0 0.0
    %188 = vmatpush.msra.mxu0 0.0
    %189 = vmatpush.msra.mxu0 0.0
    %190 = vmatpush.msra.mxu0 0.0
    %191 = vmatpush.msra.mxu0 %v173
    %192 = vmatpush.msra.mxu0 %v96
    %193 = vmatpush.msra.mxu0 %v94
    %194 = vmatmul.f32.gmra.mxu0 %v166
    %v195 = vpop.f32.mrf.mxu0
    %v196 = vadd.f32 %v136, %v195
    %197 = vmatmul.f32.gmra.mxu0 %v169
    %v198 = vpop.f32.mrf.mxu0
    %v199 = vadd.f32 %v139, %v198
    %200 = vdwg.mxu0
    %201 = vmatpush.msra.mxu0 0.0
    %202 = vmatpush.msra.mxu0 0.0
    %203 = vmatpush.msra.mxu0 0.0
    %204 = vmatpush.msra.mxu0 0.0
    %205 = vmatpush.msra.mxu0 0.0
    %206 = vmatpush.msra.mxu0 0.0
    %207 = vmatpush.msra.mxu0 0.0
    %208 = vmatpush.msra.mxu0 0.0
    %209 = vmatpush.msra.mxu0 0.0
    %210 = vmatpush.msra.mxu0 0.0
    %211 = vmatpush.msra.mxu0 0.0
    %212 = vmatpush.msra.mxu0 0.0
    %213 = vmatpush.msra.mxu0 0.0
    %214 = vmatpush.msra.mxu0 %v176
    %215 = vmatpush.msra.mxu0 %v97
    %216 = vmatpush.msra.mxu0 %v95
    %217 = vmatmul.f32.gmra.mxu0 %v166
    %v218 = vpop.f32.mrf.mxu0
    %v219 = vadd.f32 %v159, %v218
    %220 = vmatmul.f32.gmra.mxu0 %v169
    %v221 = vpop.f32.mrf.mxu0
    %v222 = vadd.f32 %v162, %v221
    %223 = vdwg.mxu0
    %v224 = vld [vmem:[%s4] sm:$0x3]
    %v226 = vperm.slane %v224, 0
    %v227 = vperm.slane %v224, 1
    %v230 = vadd.f32 %v196, %v226
    %v231 = vadd.f32 %v219, %v227
    %v232 = vadd.f32 %v199, %v226
    %v233 = vadd.f32 %v222, %v227
    %v234 = vmul.f32 %v230, 0.01
    %v235 = vmul.f32 %v231, 0.01
    %v236 = vmul.f32 %v232, 0.01
    %v237 = vmul.f32 %v233, 0.01
    %v238 = vmax.f32 %v230, %v234
    %v239 = vmax.f32 %v231, %v235
    %v240 = vmax.f32 %v232, %v236
    %v241 = vmax.f32 %v233, %v237
    %v242 = vld [vmem:[#allocation5] sm:$0xff]
    %v243 = vld [vmem:[#allocation5 + $0x8] sm:$0xff]
    %v244 = vld [vmem:[#allocation5 + $0x10] sm:$0xff]
    %v245 = vld [vmem:[#allocation5 + $0x18] sm:$0xff]
    %v246 = vld [vmem:[#allocation5 + $0x20] sm:$0xff]
    %v247 = vld [vmem:[#allocation5 + $0x28] sm:$0xff]
    %v248 = vld [vmem:[#allocation5 + $0x30] sm:$0xff]
    %v249 = vld [vmem:[#allocation5 + $0x38] sm:$0xff]
    %v250 = vld [vmem:[#allocation5 + $0x40] sm:$0xff]
    %v251 = vld [vmem:[#allocation5 + $0x48] sm:$0xff]
    %v252 = vld [vmem:[#allocation5 + $0x50] sm:$0xff]
    %v253 = vld [vmem:[#allocation5 + $0x58] sm:$0xff]
    %v254 = vld [vmem:[#allocation5 + $0x60] sm:$0xff]
    %v255 = vld [vmem:[#allocation5 + $0x68] sm:$0xff]
    %v256 = vld [vmem:[#allocation5 + $0x70] sm:$0xff]
    %v257 = vld [vmem:[#allocation5 + $0x78] sm:$0xff]
    %v258 = vld [vmem:[#allocation5 + $0x80] sm:$0xff]
    %v259 = vld [vmem:[#allocation5 + $0x88] sm:$0xff]
    %v260 = vld [vmem:[#allocation5 + $0x90] sm:$0xff]
    %v261 = vld [vmem:[#allocation5 + $0x98] sm:$0xff]
    %v262 = vld [vmem:[#allocation5 + $0xa0] sm:$0xff]
    %v263 = vld [vmem:[#allocation5 + $0xa8] sm:$0xff]
    %v264 = vld [vmem:[#allocation5 + $0xb0] sm:$0xff]
    %v265 = vld [vmem:[#allocation5 + $0xb8] sm:$0xff]
    %v266 = vld [vmem:[#allocation5 + $0xc0] sm:$0xff]
    %v267 = vld [vmem:[#allocation5 + $0xc8] sm:$0xff]
    %v268 = vld [vmem:[#allocation5 + $0xd0] sm:$0xff]
    %v269 = vld [vmem:[#allocation5 + $0xd8] sm:$0xff]
    %v270 = vld [vmem:[#allocation5 + $0xe0] sm:$0xff]
    %v271 = vld [vmem:[#allocation5 + $0xe8] sm:$0xff]
    %v272 = vld [vmem:[#allocation5 + $0xf0] sm:$0xff]
    %v273 = vld [vmem:[#allocation5 + $0xf8] sm:$0xff]
    %v274 = vld [vmem:[#allocation5 + $0x100] sm:$0xff]
    %v275 = vld [vmem:[#allocation5 + $0x108] sm:$0xff]
    %v276 = vld [vmem:[#allocation5 + $0x110] sm:$0xff]
    %v277 = vld [vmem:[#allocation5 + $0x118] sm:$0xff]
    %v278 = vld [vmem:[#allocation5 + $0x120] sm:$0xff]
    %v279 = vld [vmem:[#allocation5 + $0x128] sm:$0xff]
    %v280 = vld [vmem:[#allocation5 + $0x130] sm:$0xff]
    %v281 = vld [vmem:[#allocation5 + $0x138] sm:$0xff]
    %v282 = vld [vmem:[#allocation5 + $0x140] sm:$0xff]
    %v283 = vld [vmem:[#allocation5 + $0x148] sm:$0xff]
    %v284 = vld [vmem:[#allocation5 + $0x150] sm:$0xff]
    %v285 = vld [vmem:[#allocation5 + $0x158] sm:$0xff]
    %v286 = vld [vmem:[#allocation5 + $0x160] sm:$0xff]
    %v287 = vld [vmem:[#allocation5 + $0x168] sm:$0xff]
    %v288 = vld [vmem:[#allocation5 + $0x170] sm:$0xff]
    %v289 = vld [vmem:[#allocation5 + $0x178] sm:$0xff]
    %v290 = vld [vmem:[#allocation5 + $0x180] sm:$0xff]
    %v291 = vld [vmem:[#allocation5 + $0x188] sm:$0xff]
    %v292 = vld [vmem:[#allocation5 + $0x190] sm:$0xff]
    %v293 = vld [vmem:[#allocation5 + $0x198] sm:$0xff]
    %v294 = vld [vmem:[#allocation5 + $0x1a0] sm:$0xff]
    %v295 = vld [vmem:[#allocation5 + $0x1a8] sm:$0xff]
    %v296 = vld [vmem:[#allocation5 + $0x1b0] sm:$0xff]
    %v297 = vld [vmem:[#allocation5 + $0x1b8] sm:$0xff]
    %v298 = vld [vmem:[#allocation5 + $0x1c0] sm:$0xff]
    %v299 = vld [vmem:[#allocation5 + $0x1c8] sm:$0xff]
    %v300 = vld [vmem:[#allocation5 + $0x1d0] sm:$0xff]
    %v301 = vld [vmem:[#allocation5 + $0x1d8] sm:$0xff]
    %v302 = vld [vmem:[#allocation5 + $0x1e0] sm:$0xff]
    %v303 = vld [vmem:[#allocation5 + $0x1e8] sm:$0xff]
    %v304 = vld [vmem:[#allocation5 + $0x1f0] sm:$0xff]
    %v305 = vld [vmem:[#allocation5 + $0x1f8] sm:$0xff]
    %v306 = vld [vmem:[#allocation7] sm:$0x3]
    %v308 = vperm.slane %v306, 0
    %v309 = vperm.slane %v306, 1
    %312 = vmatpush.msra.mxu0 %v272
    %313 = vmatpush.msra.mxu0 %v270
    %314 = vmatpush.msra.mxu0 %v268
    %315 = vmatpush.msra.mxu0 %v266
    %316 = vmatpush.msra.mxu0 %v264
    %317 = vmatpush.msra.mxu0 %v262
    %318 = vmatpush.msra.mxu0 %v260
    %319 = vmatpush.msra.mxu0 %v258
    %320 = vmatpush.msra.mxu0 %v256
    %321 = vmatpush.msra.mxu0 %v254
    %322 = vmatpush.msra.mxu0 %v252
    %323 = vmatpush.msra.mxu0 %v250
    %324 = vmatpush.msra.mxu0 %v248
    %325 = vmatpush.msra.mxu0 %v246
    %326 = vmatpush.msra.mxu0 %v244
    %327 = vmatpush.msra.mxu0 %v242
    %328 = vmatmul.f32.gmra.mxu0 %v238
    %v329 = vpop.f32.mrf.mxu0
    %v330 = vadd.f32 %v308, %v329
    %331 = vmatmul.f32.gmra.mxu0 %v240
    %v332 = vpop.f32.mrf.mxu0
    %v333 = vadd.f32 %v308, %v332
    %334 = vdwg.mxu0
    %335 = vmatpush.msra.mxu0 %v304
    %336 = vmatpush.msra.mxu0 %v302
    %337 = vmatpush.msra.mxu0 %v300
    %338 = vmatpush.msra.mxu0 %v298
    %339 = vmatpush.msra.mxu0 %v296
    %340 = vmatpush.msra.mxu0 %v294
    %341 = vmatpush.msra.mxu0 %v292
    %342 = vmatpush.msra.mxu0 %v290
    %343 = vmatpush.msra.mxu0 %v288
    %344 = vmatpush.msra.mxu0 %v286
    %345 = vmatpush.msra.mxu0 %v284
    %346 = vmatpush.msra.mxu0 %v282
    %347 = vmatpush.msra.mxu0 %v280
    %348 = vmatpush.msra.mxu0 %v278
    %349 = vmatpush.msra.mxu0 %v276
    %350 = vmatpush.msra.mxu0 %v274
    %351 = vmatmul.f32.gmra.mxu0 %v239
    %v352 = vpop.f32.mrf.mxu0
    %v353 = vadd.f32 %v330, %v352
    %354 = vmatmul.f32.gmra.mxu0 %v241
    %v355 = vpop.f32.mrf.mxu0
    %v356 = vadd.f32 %v333, %v355
    %357 = vdwg.mxu0
    %358 = vmatpush.msra.mxu0 %v273
    %359 = vmatpush.msra.mxu0 %v271
    %360 = vmatpush.msra.mxu0 %v269
    %361 = vmatpush.msra.mxu0 %v267
    %362 = vmatpush.msra.mxu0 %v265
    %363 = vmatpush.msra.mxu0 %v263
    %364 = vmatpush.msra.mxu0 %v261
    %365 = vmatpush.msra.mxu0 %v259
    %366 = vmatpush.msra.mxu0 %v257
    %367 = vmatpush.msra.mxu0 %v255
    %368 = vmatpush.msra.mxu0 %v253
    %369 = vmatpush.msra.mxu0 %v251
    %370 = vmatpush.msra.mxu0 %v249
    %371 = vmatpush.msra.mxu0 %v247
    %372 = vmatpush.msra.mxu0 %v245
    %373 = vmatpush.msra.mxu0 %v243
    %374 = vmatmul.f32.gmra.mxu0 %v238
    %v375 = vpop.f32.mrf.mxu0
    %v376 = vadd.f32 %v309, %v375
    %377 = vmatmul.f32.gmra.mxu0 %v240
    %v378 = vpop.f32.mrf.mxu0
    %v379 = vadd.f32 %v309, %v378
    %380 = vdwg.mxu0
    %381 = vmatpush.msra.mxu0 %v305
    %382 = vmatpush.msra.mxu0 %v303
    %383 = vmatpush.msra.mxu0 %v301
    %384 = vmatpush.msra.mxu0 %v299
    %385 = vmatpush.msra.mxu0 %v297
    %386 = vmatpush.msra.mxu0 %v295
    %387 = vmatpush.msra.mxu0 %v293
    %388 = vmatpush.msra.mxu0 %v291
    %389 = vmatpush.msra.mxu0 %v289
    %390 = vmatpush.msra.mxu0 %v287
    %391 = vmatpush.msra.mxu0 %v285
    %392 = vmatpush.msra.mxu0 %v283
    %393 = vmatpush.msra.mxu0 %v281
    %394 = vmatpush.msra.mxu0 %v279
    %395 = vmatpush.msra.mxu0 %v277
    %396 = vmatpush.msra.mxu0 %v275
    %397 = vmatmul.f32.gmra.mxu0 %v239
    %v398 = vpop.f32.mrf.mxu0
    %v399 = vadd.f32 %v376, %v398
    %400 = vmatmul.f32.gmra.mxu0 %v241
    %v401 = vpop.f32.mrf.mxu0
    %v402 = vadd.f32 %v379, %v401
    %403 = vdwg.mxu0
    %v404 = vmul.f32 %v353, 0.01
    %v405 = vmul.f32 %v399, 0.01
    %v406 = vmul.f32 %v356, 0.01
    %v407 = vmul.f32 %v402, 0.01
    %v408 = vmax.f32 %v353, %v404
    %v409 = vmax.f32 %v399, %v405
    %v410 = vmax.f32 %v356, %v406
    %v411 = vmax.f32 %v402, %v407
    %v412 = vld [vmem:[#allocation8] sm:$0x3]
    %v414 = vperm.slane %v412, 0
    %v415 = vperm.slane %v412, 1
    %v418 = vmul.f32 %v408, %v414
    %v419 = vmul.f32 %v409, %v415
    %v420 = vmul.f32 %v410, %v414
    %v421 = vmul.f32 %v411, %v415
    %v422 = vadd.f32 %v418, %v419
    %423 = vadd.xlane.f32.xlu0 %v422
    %v424 = vpop.xlane.xlu0 %423
    %v425 = vadd.f32 %v420, %v421
    %426 = vadd.xlane.f32.xlu0 %v425
    %v427 = vpop.xlane.xlu0 %426
    %s428 = sld [smem:[#allocation2]]
    %v429 = vstv %s428
    %v430 = vadd.f32 %v424, %v429
    %v431 = vadd.f32 %v427, %v429
    %v434 = vlaneseq
    %v435 = vand.u32 %v434, 127
    %v436 = vperm.slane %v430, %v435
    %v437 = vadd.s32 %v435, 4294967288
    %v438 = vperm.slane %v431, %v437
    %vm439 = vcmask 130112
    %v440 = vsel %vm439, %v438, %v436
    %vm442 = vcmask 122880
    %443 = vst.msk [vmem:[%s9] sm:$0x1] %vm442, %v440
    // Predicated region
    $region54: #{_lambda_.1} parent=1 // pred_check
      _
    $region55: #{_lambda_.1} parent=1 // pred_check_branch
      %445 = sbr.rel (0) target = $region57
    $region56: #{_lambda_.1} parent=1 // pred_region
      _
    $region57: #{_lambda_.1} parent=1 // pred_fallthru
      _
    // Predicated region
    $region58: #{_lambda_.1} parent=1 // pred_check
      _
    $region59: #{_lambda_.1} parent=1 // pred_check_branch
      %447 = sbr.rel (0) target = $region61
    $region60: #{_lambda_.1} parent=1 // pred_region
      _
    $region61: #{_lambda_.1} parent=1 // pred_fallthru
      _
    %448 = vsyncpa [#allocation4], 1
    %449 = vsyncpa [#allocation6], 1
    %450 = vsyncpa [#allocation9], 1

</llo_original>
